<compile_context>
chip_gen: v5e
topology: v5e:2x2
jax: 0.10.0
libtpu: 0.0.40
codegen_flags: <defaults>
</compile_context>

<pallas_src>
import jax
import jax.numpy as jnp
from jax.experimental import pallas as pl
from jax.experimental.pallas import tpu as pltpu

D_IN = 28 * 28   # 784
H1 = 100
H2 = 50
D_OUT = 10

# Lane-aligned (x128) padded output dims for each layer.
H1_P = 128
H2_P = 128
D_OUT_P = 128

TB_CAP = 2048    # max batch-tile rows (bf16 x tile: 2048*784*2B ~= 3 MiB per buffer)


def _round_up(n, m):
    return ((n + m - 1) // m) * m


def _cdiv(a, b):
    return -(-a // b)


def _mlp_kernel(x_ref, w1_ref, b1_ref, w2_ref, b2_ref, w3_ref, b3_ref, out_ref):
    # x_ref : (TB, 784) bf16 (streamed per grid step)
    # w*_ref: bf16 weights, zero-padded to 128-wide outputs (resident in VMEM)
    # b*_ref: (1, 128) f32
    # out_ref: (TB, 128) f32 -- lane-dense, full-width unmasked stores
    x = x_ref[...]
    h1 = jnp.dot(x, w1_ref[...], preferred_element_type=jnp.float32) + b1_ref[...]
    h1 = jnp.maximum(h1, 0.0).astype(jnp.bfloat16)
    h2 = jnp.dot(h1, w2_ref[...], preferred_element_type=jnp.float32) + b2_ref[...]
    h2 = jnp.maximum(h2, 0.0).astype(jnp.bfloat16)
    y = jnp.dot(h2, w3_ref[...], preferred_element_type=jnp.float32) + b3_ref[...]
    out_ref[...] = y


def _choose_batch_tile(B):
    # At least 2 grid steps (so both v7x TensorCores get work) and TB chosen relative
    # to B so dead-row padding is bounded to one partial tile + rounding to 16
    # (bf16 sublane packing).
    steps = max(2, _cdiv(B, TB_CAP))
    tb = _round_up(_cdiv(B, steps), 16)
    return tb, tb * steps


def linear_classifier(x, params):
    """x: any array reshapable to (-1, 784).
    params: ((w1, b1), (w2, b2), (w3, b3)) with weights stored as (in, out)."""
    (w1, b1), (w2, b2), (w3, b3) = params
    x_flat = x.reshape(-1, D_IN)
    B = x_flat.shape[0]
    TB, B_pad = _choose_batch_tile(B)

    x_bf = x_flat.astype(jnp.bfloat16)
    if B_pad != B:
        # Only pad along the batch dim (no 784->896 feature padding, no big HBM copy
        # when B already divides the tile).
        x_bf = jnp.zeros((B_pad, D_IN), jnp.bfloat16).at[:B].set(x_bf)

    # Zero-padded weight columns / bias entries stay exactly zero through ReLU, and
    # the padded rows of the following weight are also zero, so valid outputs are
    # exact; padded columns are sliced off at the end.
    w1_p = jnp.zeros((D_IN, H1_P), jnp.bfloat16).at[:, :H1].set(w1.astype(jnp.bfloat16))
    b1_p = jnp.zeros((1, H1_P), jnp.float32).at[0, :H1].set(b1)
    w2_p = jnp.zeros((H1_P, H2_P), jnp.bfloat16).at[:H1, :H2].set(w2.astype(jnp.bfloat16))
    b2_p = jnp.zeros((1, H2_P), jnp.float32).at[0, :H2].set(b2)
    w3_p = jnp.zeros((H2_P, D_OUT_P), jnp.bfloat16).at[:H2, :D_OUT].set(w3.astype(jnp.bfloat16))
    b3_p = jnp.zeros((1, D_OUT_P), jnp.float32).at[0, :D_OUT].set(b3)

    out_p = pl.pallas_call(
        _mlp_kernel,
        out_shape=jax.ShapeDtypeStruct((B_pad, D_OUT_P), jnp.float32),
        grid=(B_pad // TB,),
        in_specs=[
            pl.BlockSpec((TB, D_IN), lambda i: (i, 0)),       # streamed x tile
            pl.BlockSpec((D_IN, H1_P), lambda i: (0, 0)),     # resident weights/biases
            pl.BlockSpec((1, H1_P), lambda i: (0, 0)),
            pl.BlockSpec((H1_P, H2_P), lambda i: (0, 0)),
            pl.BlockSpec((1, H2_P), lambda i: (0, 0)),
            pl.BlockSpec((H2_P, D_OUT_P), lambda i: (0, 0)),
            pl.BlockSpec((1, D_OUT_P), lambda i: (0, 0)),
        ],
        out_specs=pl.BlockSpec((TB, D_OUT_P), lambda i: (i, 0)),
        compiler_params=pltpu.CompilerParams(
            dimension_semantics=("parallel",),
            vmem_limit_bytes=32 << 20,
        ),
    )(x_bf, w1_p, b1_p, w2_p, b2_p, w3_p, b3_p)

    return out_p[:B, :D_OUT]


if __name__ == "__main__":
    key = jax.random.PRNGKey(0)
    kx, kw1, kb1, kw2, kb2, kw3, kb3 = jax.random.split(key, 7)

    # MNIST-shaped input implied by x.view(-1, 28*28): (batch=2, 1, 28, 28).
    x = jax.random.normal(kx, (2, 1, 28, 28), dtype=jnp.float32)

    def init_linear(kw, kb, fan_in, fan_out):
        # PyTorch-style uniform(-1/sqrt(fan_in), 1/sqrt(fan_in)) init, deterministic.
        lim = 1.0 / (fan_in ** 0.5)
        w = jax.random.uniform(kw, (fan_in, fan_out), jnp.float32, -lim, lim)
        b = jax.random.uniform(kb, (fan_out,), jnp.float32, -lim, lim)
        return w, b

    params = (
        init_linear(kw1, kb1, D_IN, H1),
        init_linear(kw2, kb2, H1, H2),
        init_linear(kw3, kb3, H2, D_OUT),
    )

    y = linear_classifier(x, params)
    y = jax.block_until_ready(y)

    # Reference mirrors the kernel's numerics (bf16 operands, f32 accumulation) so
    # the tolerance check is meaningful after dropping Precision.HIGHEST.
    def ref_forward(x, params):
        (w1, b1), (w2, b2), (w3, b3) = params
        h = x.reshape(-1, D_IN).astype(jnp.bfloat16)
        h = jnp.dot(h, w1.astype(jnp.bfloat16), preferred_element_type=jnp.float32) + b1
        h = jnp.maximum(h, 0.0).astype(jnp.bfloat16)
        h = jnp.dot(h, w2.astype(jnp.bfloat16), preferred_element_type=jnp.float32) + b2
        h = jnp.maximum(h, 0.0).astype(jnp.bfloat16)
        return jnp.dot(h, w3.astype(jnp.bfloat16), preferred_element_type=jnp.float32) + b3

    ref = ref_forward(x, params)
    assert y.shape == (x.shape[0], D_OUT)
    assert y.dtype == jnp.float32
    assert bool(jnp.allclose(y, ref, atol=2e-2, rtol=2e-2))

    print("KERNEL_OK")
</pallas_src>

<mosaic_0001>
module attributes {stable_mosaic.version = 11 : i64} {
  func.func @_mlp_kernel(%arg0: i32, %arg1: memref<16x784xbf16, #tpu.memory_space<vmem>>, %arg2: memref<784x128xbf16, #tpu.memory_space<vmem>>, %arg3: memref<1x128xf32, #tpu.memory_space<vmem>>, %arg4: memref<128x128xbf16, #tpu.memory_space<vmem>>, %arg5: memref<1x128xf32, #tpu.memory_space<vmem>>, %arg6: memref<128x128xbf16, #tpu.memory_space<vmem>>, %arg7: memref<1x128xf32, #tpu.memory_space<vmem>>, %arg8: memref<16x128xf32, #tpu.memory_space<vmem>>) attributes {dimension_semantics = [#tpu.dimension_semantics<parallel>], iteration_bounds = array<i64: 2>, scalar_prefetch = 0 : i64, scratch_operands = 0 : i64, tpu.core_type = #tpu.core_type<tc>, window_params = [{transform_indices = @transform_0, window_bounds = array<i64: 16, 784>}, {pipeline_mode = #tpu.pipeline_mode<synchronous>, transform_indices = @transform_1, window_bounds = array<i64: 784, 128>}, {pipeline_mode = #tpu.pipeline_mode<synchronous>, transform_indices = @transform_2, window_bounds = array<i64: 1, 128>}, {pipeline_mode = #tpu.pipeline_mode<synchronous>, transform_indices = @transform_3, window_bounds = array<i64: 128, 128>}, {pipeline_mode = #tpu.pipeline_mode<synchronous>, transform_indices = @transform_4, window_bounds = array<i64: 1, 128>}, {pipeline_mode = #tpu.pipeline_mode<synchronous>, transform_indices = @transform_5, window_bounds = array<i64: 128, 128>}, {pipeline_mode = #tpu.pipeline_mode<synchronous>, transform_indices = @transform_6, window_bounds = array<i64: 1, 128>}, {transform_indices = @transform_7, window_bounds = array<i64: 16, 128>}]} {
    %c0 = arith.constant 0 : index
    %c0_0 = arith.constant 0 : index
    %0 = vector.load %arg1[%c0, %c0_0] : memref<16x784xbf16, #tpu.memory_space<vmem>>, vector<16x784xbf16>
    %c0_1 = arith.constant 0 : index
    %c0_2 = arith.constant 0 : index
    %1 = vector.load %arg2[%c0_1, %c0_2] : memref<784x128xbf16, #tpu.memory_space<vmem>>, vector<784x128xbf16>
    %cst = arith.constant dense<0.000000e+00> : vector<16x128xf32>
    %2 = tpu.matmul %0, %1, %cst {dimension_numbers = #tpu.dot_dimension_numbers<[1], [0], [0], [1], [0, 0, 1, 1], [], []>} : vector<16x784xbf16>, vector<784x128xbf16>, vector<16x128xf32> -> vector<16x128xf32>
    %c0_3 = arith.constant 0 : index
    %c0_4 = arith.constant 0 : index
    %3 = vector.load %arg3[%c0_3, %c0_4] : memref<1x128xf32, #tpu.memory_space<vmem>>, vector<1x128xf32>
    %4 = vector.broadcast %3 : vector<1x128xf32> to vector<16x128xf32>
    %5 = arith.addf %2, %4 : vector<16x128xf32>
    %cst_5 = arith.constant 0.000000e+00 : f32
    %6 = vector.broadcast %cst_5 : f32 to vector<16x128xf32>
    %7 = arith.maximumf %5, %6 : vector<16x128xf32>
    %8 = arith.truncf %7 : vector<16x128xf32> to vector<16x128xbf16>
    %c0_6 = arith.constant 0 : index
    %c0_7 = arith.constant 0 : index
    %9 = vector.load %arg4[%c0_6, %c0_7] : memref<128x128xbf16, #tpu.memory_space<vmem>>, vector<128x128xbf16>
    %cst_8 = arith.constant dense<0.000000e+00> : vector<16x128xf32>
    %10 = tpu.matmul %8, %9, %cst_8 {dimension_numbers = #tpu.dot_dimension_numbers<[1], [0], [0], [1], [0, 0, 1, 1], [], []>} : vector<16x128xbf16>, vector<128x128xbf16>, vector<16x128xf32> -> vector<16x128xf32>
    %c0_9 = arith.constant 0 : index
    %c0_10 = arith.constant 0 : index
    %11 = vector.load %arg5[%c0_9, %c0_10] : memref<1x128xf32, #tpu.memory_space<vmem>>, vector<1x128xf32>
    %12 = vector.broadcast %11 : vector<1x128xf32> to vector<16x128xf32>
    %13 = arith.addf %10, %12 : vector<16x128xf32>
    %cst_11 = arith.constant 0.000000e+00 : f32
    %14 = vector.broadcast %cst_11 : f32 to vector<16x128xf32>
    %15 = arith.maximumf %13, %14 : vector<16x128xf32>
    %16 = arith.truncf %15 : vector<16x128xf32> to vector<16x128xbf16>
    %c0_12 = arith.constant 0 : index
    %c0_13 = arith.constant 0 : index
    %17 = vector.load %arg6[%c0_12, %c0_13] : memref<128x128xbf16, #tpu.memory_space<vmem>>, vector<128x128xbf16>
    %cst_14 = arith.constant dense<0.000000e+00> : vector<16x128xf32>
    %18 = tpu.matmul %16, %17, %cst_14 {dimension_numbers = #tpu.dot_dimension_numbers<[1], [0], [0], [1], [0, 0, 1, 1], [], []>} : vector<16x128xbf16>, vector<128x128xbf16>, vector<16x128xf32> -> vector<16x128xf32>
    %c0_15 = arith.constant 0 : index
    %c0_16 = arith.constant 0 : index
    %19 = vector.load %arg7[%c0_15, %c0_16] : memref<1x128xf32, #tpu.memory_space<vmem>>, vector<1x128xf32>
    %20 = vector.broadcast %19 : vector<1x128xf32> to vector<16x128xf32>
    %21 = arith.addf %18, %20 : vector<16x128xf32>
    %c0_17 = arith.constant 0 : index
    %c0_18 = arith.constant 0 : index
    %22 = vector.load %arg8[%c0_17, %c0_18] : memref<16x128xf32, #tpu.memory_space<vmem>>, vector<16x128xf32>
    tpu.vector_store %arg8[%c0_17, %c0_18], %21 {strides = array<i32>} : memref<16x128xf32, #tpu.memory_space<vmem>>, vector<16x128xf32>,
    return
  }
  func.func @transform_0(%arg0: i32) -> (i32, i32) {
    %c0_i32 = arith.constant 0 : i32
    %c0_i32_0 = arith.constant 0 : i32
    return %arg0, %c0_i32 : i32, i32
  }
  func.func @transform_1(%arg0: i32) -> (i32, i32) {
    %c0_i32 = arith.constant 0 : i32
    %c0_i32_0 = arith.constant 0 : i32
    %c0_i32_1 = arith.constant 0 : i32
    return %c0_i32, %c0_i32_0 : i32, i32
  }
  func.func @transform_2(%arg0: i32) -> (i32, i32) {
    %c0_i32 = arith.constant 0 : i32
    %c0_i32_0 = arith.constant 0 : i32
    %c0_i32_1 = arith.constant 0 : i32
    return %c0_i32, %c0_i32_0 : i32, i32
  }
  func.func @transform_3(%arg0: i32) -> (i32, i32) {
    %c0_i32 = arith.constant 0 : i32
    %c0_i32_0 = arith.constant 0 : i32
    %c0_i32_1 = arith.constant 0 : i32
    return %c0_i32, %c0_i32_0 : i32, i32
  }
  func.func @transform_4(%arg0: i32) -> (i32, i32) {
    %c0_i32 = arith.constant 0 : i32
    %c0_i32_0 = arith.constant 0 : i32
    %c0_i32_1 = arith.constant 0 : i32
    return %c0_i32, %c0_i32_0 : i32, i32
  }
  func.func @transform_5(%arg0: i32) -> (i32, i32) {
    %c0_i32 = arith.constant 0 : i32
    %c0_i32_0 = arith.constant 0 : i32
    %c0_i32_1 = arith.constant 0 : i32
    return %c0_i32, %c0_i32_0 : i32, i32
  }
  func.func @transform_6(%arg0: i32) -> (i32, i32) {
    %c0_i32 = arith.constant 0 : i32
    %c0_i32_0 = arith.constant 0 : i32
    %c0_i32_1 = arith.constant 0 : i32
    return %c0_i32, %c0_i32_0 : i32, i32
  }
  func.func @transform_7(%arg0: i32) -> (i32, i32) {
    %c0_i32 = arith.constant 0 : i32
    %c0_i32_0 = arith.constant 0 : i32
    return %arg0, %c0_i32 : i32, i32
  }
}

</mosaic_0001>

<llo_original>
// kernel: tpu_custom_call.1
$region0: #{tpu_custom_call.1}
  #allocation0 [shape = 'u32[]', space=smem, size = 0x4, offset = 0x4, fixed_abs, tag = 'smem constant byte address 0x4 - core index']
  #allocation1 [shape = 'u32[72,128]{1,0:T(1,128)}', space=vmem, size = 0x9000, scoped, tag = 'internal scratch']
  %s0 = inlined_call_operand.hbm [shape: bf16[32,784], index: 0, kind: input, shape index: {}]
  %s1 = inlined_call_operand.hbm [shape: bf16[784,128], index: 1, kind: input, shape index: {}]
  %s2 = inlined_call_operand.vmem [shape: f32[1,128], index: 2, kind: input, shape index: {}]
  %s3 = inlined_call_operand.hbm [shape: bf16[128,128], index: 3, kind: input, shape index: {}]
  %s4 = inlined_call_operand.vmem [shape: f32[1,128], index: 4, kind: input, shape index: {}]
  %s5 = inlined_call_operand.hbm [shape: bf16[128,128], index: 5, kind: input, shape index: {}]
  %s6 = inlined_call_operand.vmem [shape: f32[1,128], index: 6, kind: input, shape index: {}]
  %s7 = inlined_call_operand.hbm [shape: f32[32,128], index: 7, kind: output, shape index: {}]
  %s8 = sld [smem:[#allocation0]]
  $region77: #{tpu_custom_call.1} parent=0
    _
  %s10 = ssub.s32 1, %s8
  %s11 = scalar_select 0, %s10, %s8
  $region1: #{tpu_custom_call.1} parent=0
    #allocation2 [shape = 'u8[57344]{0}', space=vmem, size = 0xe000, scoped, tag = 'input window, operand 0']
    #allocation3 [shape = 's32[2]{0}', space=sflag, size = 0x8, scoped, tag = 'scoped memory for tpu_custom_call.1']
    #allocation4 [shape = 's32[2]{0}', space=sflag, size = 0x8, scoped, tag = 'scoped memory for tpu_custom_call.1']
    #allocation5 [shape = 'u8[200704]{0}', space=vmem, size = 0x31000, scoped, tag = 'input window, operand 1, single buffered']
    #allocation6 [shape = 's32[1]{0}', space=sflag, size = 0x4, scoped, tag = 'scoped memory for tpu_custom_call.1']
    #allocation7 [shape = 'u8[32768]{0}', space=vmem, size = 0x8000, scoped, tag = 'input window, operand 3, single buffered']
    #allocation8 [shape = 'u8[32768]{0}', space=vmem, size = 0x8000, scoped, tag = 'input window, operand 5, single buffered']
    #allocation9 [shape = 's32[1]{0}', space=sflag, size = 0x4, scoped, tag = 'scoped memory for tpu_custom_call.1']
    #allocation10 [shape = 'u8[16384]{0}', space=vmem, size = 0x4000, scoped, tag = 'output window, operand 0']
    %12 = vsyncpa [#allocation3], 0
    %s13 = scalar_lea.sflag [#allocation3], 1
    %14 = vsyncpa %s13, 0
    %15 = vsyncpa [#allocation6], 0
    %16 = vsyncpa [#allocation9], 0
    %17 = vsyncpa [#allocation4], 0
    %s18 = scalar_lea.sflag [#allocation4], 1
    %19 = vsyncpa %s18, 0
    loop: start=0, step=1, limit=4
    $region2: #{tpu_custom_call.1} parent=1 // loop_pre_header
      _
    $region3: #{tpu_custom_call.1} parent=1 // loop_header
      %s21 = sphi 0, %s25
      %p22 = scmp.ge.s32.totalorder %s21, 4
      %s31 = sphi 0, %s33
      %s34 = sphi 0, %s31
      %s35 = sphi 0, %s34
      %s51 = sphi 0, %s35
      %s55 = sphi 0, %s55
      %s57 = sphi 0, %s55
      %s58 = sphi 0, %s57
      %s72 = sphi 0, %s58
      %s76 = sphi 0, %s76
      %s78 = sphi 0, %s76
      %s79 = sphi 0, %s78
      %s93 = sphi 0, %s79
      %s97 = sphi 0, %s97
      %s99 = sphi 0, %s97
      %s100 = sphi 0, %s99
      %s114 = sphi 0, %s100
      %s118 = sphi 0, %s118
      %s120 = sphi 0, %s118
      %s121 = sphi 0, %s120
      %s135 = sphi 0, %s121
      %s139 = sphi 0, %s139
      %s141 = sphi 0, %s139
      %s142 = sphi 0, %s141
      %s156 = sphi 0, %s142
      %s160 = sphi 0, %s160
      %s162 = sphi 0, %s160
      %s163 = sphi 0, %s162
      %s177 = sphi 0, %s163
      %s183 = sphi 0, %s185
      %s186 = sphi 0, %s183
      %s187 = sphi 0, %s186
      %s203 = sphi 0, %s187
    $region4: #{tpu_custom_call.1} parent=1 // loop_header_branch
      %24 = sbr.rel (%p22) target = $region8
    $region5: #{tpu_custom_call.1} parent=1 // loop_body
      %s26 = ssub.s32 %s21, 1
      %s27 = ssub.s32 %s21, 2
      %s28 = sadd.s32 %s21, 1
      %s29 = ssub.s32 %s21, %s28
      %p30 = scmp.eq.s32.totalorder %s29, 0
      %s32 = sadd.s32 %s31, 1
      %s33 = scalar_select %p30, %s31, %s32
      %p36 = pneg %p30
      %p37 = scmp.eq.s32.totalorder %s21, 1
      %p38 = por %p36, %p37
      %p39 = scmp.ne.s32.totalorder %s31, %s34
      %p40 = scmp.eq.s32.totalorder %s21, 0
      %p41 = por %p39, %p40
      %p42 = scmp.ne.s32.totalorder %s31, %s34
      %p43 = scmp.eq.s32.totalorder %s26, 1
      %p44 = por %p42, %p43
      %p45 = scmp.ne.s32.totalorder %s34, %s35
      %p46 = scmp.eq.s32.totalorder %s26, 0
      %p47 = por %p45, %p46
      %p48 = scmp.ne.s32.totalorder %s34, %s35
      %p49 = scmp.eq.s32.totalorder %s27, 1
      %p50 = por %p48, %p49
      %p52 = scmp.ne.s32.totalorder %s35, %s51
      %p53 = scmp.eq.s32.totalorder %s27, 0
      %p54 = por %p52, %p53
      %s56 = sadd.s32 %s55, 1
      %p59 = scmp.eq.s32.totalorder %s21, 1
      %p60 = scmp.ne.s32.totalorder %s55, %s57
      %p61 = scmp.eq.s32.totalorder %s21, 0
      %p62 = por %p60, %p61
      %p63 = scmp.ne.s32.totalorder %s55, %s57
      %p64 = scmp.eq.s32.totalorder %s26, 1
      %p65 = por %p63, %p64
      %p66 = scmp.ne.s32.totalorder %s57, %s58
      %p67 = scmp.eq.s32.totalorder %s26, 0
      %p68 = por %p66, %p67
      %p69 = scmp.ne.s32.totalorder %s57, %s58
      %p70 = scmp.eq.s32.totalorder %s27, 1
      %p71 = por %p69, %p70
      %p73 = scmp.ne.s32.totalorder %s58, %s72
      %p74 = scmp.eq.s32.totalorder %s27, 0
      %p75 = por %p73, %p74
      %s77 = sadd.s32 %s76, 1
      %p80 = scmp.eq.s32.totalorder %s21, 1
      %p81 = scmp.ne.s32.totalorder %s76, %s78
      %p82 = scmp.eq.s32.totalorder %s21, 0
      %p83 = por %p81, %p82
      %p84 = scmp.ne.s32.totalorder %s76, %s78
      %p85 = scmp.eq.s32.totalorder %s26, 1
      %p86 = por %p84, %p85
      %p87 = scmp.ne.s32.totalorder %s78, %s79
      %p88 = scmp.eq.s32.totalorder %s26, 0
      %p89 = por %p87, %p88
      %p90 = scmp.ne.s32.totalorder %s78, %s79
      %p91 = scmp.eq.s32.totalorder %s27, 1
      %p92 = por %p90, %p91
      %p94 = scmp.ne.s32.totalorder %s79, %s93
      %p95 = scmp.eq.s32.totalorder %s27, 0
      %p96 = por %p94, %p95
      %s98 = sadd.s32 %s97, 1
      %p101 = scmp.eq.s32.totalorder %s21, 1
      %p102 = scmp.ne.s32.totalorder %s97, %s99
      %p103 = scmp.eq.s32.totalorder %s21, 0
      %p104 = por %p102, %p103
      %p105 = scmp.ne.s32.totalorder %s97, %s99
      %p106 = scmp.eq.s32.totalorder %s26, 1
      %p107 = por %p105, %p106
      %p108 = scmp.ne.s32.totalorder %s99, %s100
      %p109 = scmp.eq.s32.totalorder %s26, 0
      %p110 = por %p108, %p109
      %p111 = scmp.ne.s32.totalorder %s99, %s100
      %p112 = scmp.eq.s32.totalorder %s27, 1
      %p113 = por %p111, %p112
      %p115 = scmp.ne.s32.totalorder %s100, %s114
      %p116 = scmp.eq.s32.totalorder %s27, 0
      %p117 = por %p115, %p116
      %s119 = sadd.s32 %s118, 1
      %p122 = scmp.eq.s32.totalorder %s21, 1
      %p123 = scmp.ne.s32.totalorder %s118, %s120
      %p124 = scmp.eq.s32.totalorder %s21, 0
      %p125 = por %p123, %p124
      %p126 = scmp.ne.s32.totalorder %s118, %s120
      %p127 = scmp.eq.s32.totalorder %s26, 1
      %p128 = por %p126, %p127
      %p129 = scmp.ne.s32.totalorder %s120, %s121
      %p130 = scmp.eq.s32.totalorder %s26, 0
      %p131 = por %p129, %p130
      %p132 = scmp.ne.s32.totalorder %s120, %s121
      %p133 = scmp.eq.s32.totalorder %s27, 1
      %p134 = por %p132, %p133
      %p136 = scmp.ne.s32.totalorder %s121, %s135
      %p137 = scmp.eq.s32.totalorder %s27, 0
      %p138 = por %p136, %p137
      %s140 = sadd.s32 %s139, 1
      %p143 = scmp.eq.s32.totalorder %s21, 1
      %p144 = scmp.ne.s32.totalorder %s139, %s141
      %p145 = scmp.eq.s32.totalorder %s21, 0
      %p146 = por %p144, %p145
      %p147 = scmp.ne.s32.totalorder %s139, %s141
      %p148 = scmp.eq.s32.totalorder %s26, 1
      %p149 = por %p147, %p148
      %p150 = scmp.ne.s32.totalorder %s141, %s142
      %p151 = scmp.eq.s32.totalorder %s26, 0
      %p152 = por %p150, %p151
      %p153 = scmp.ne.s32.totalorder %s141, %s142
      %p154 = scmp.eq.s32.totalorder %s27, 1
      %p155 = por %p153, %p154
      %p157 = scmp.ne.s32.totalorder %s142, %s156
      %p158 = scmp.eq.s32.totalorder %s27, 0
      %p159 = por %p157, %p158
      %s161 = sadd.s32 %s160, 1
      %p164 = scmp.eq.s32.totalorder %s21, 1
      %p165 = scmp.ne.s32.totalorder %s160, %s162
      %p166 = scmp.eq.s32.totalorder %s21, 0
      %p167 = por %p165, %p166
      %p168 = scmp.ne.s32.totalorder %s160, %s162
      %p169 = scmp.eq.s32.totalorder %s26, 1
      %p170 = por %p168, %p169
      %p171 = scmp.ne.s32.totalorder %s162, %s163
      %p172 = scmp.eq.s32.totalorder %s26, 0
      %p173 = por %p171, %p172
      %p174 = scmp.ne.s32.totalorder %s162, %s163
      %p175 = scmp.eq.s32.totalorder %s27, 1
      %p176 = por %p174, %p175
      %p178 = scmp.ne.s32.totalorder %s163, %s177
      %p179 = scmp.eq.s32.totalorder %s27, 0
      %p180 = por %p178, %p179
      %s181 = ssub.s32 %s21, %s28
      %p182 = scmp.eq.s32.totalorder %s181, 0
      %s184 = sadd.s32 %s183, 1
      %s185 = scalar_select %p182, %s183, %s184
      %p188 = pneg %p182
      %p189 = scmp.eq.s32.totalorder %s21, 1
      %p190 = por %p188, %p189
      %p191 = scmp.ne.s32.totalorder %s183, %s186
      %p192 = scmp.eq.s32.totalorder %s21, 0
      %p193 = por %p191, %p192
      %p194 = scmp.ne.s32.totalorder %s183, %s186
      %p195 = scmp.eq.s32.totalorder %s26, 1
      %p196 = por %p194, %p195
      %p197 = scmp.ne.s32.totalorder %s186, %s187
      %p198 = scmp.eq.s32.totalorder %s26, 0
      %p199 = por %p197, %p198
      %p200 = scmp.ne.s32.totalorder %s186, %s187
      %p201 = scmp.eq.s32.totalorder %s27, 1
      %p202 = por %p200, %p201
      %p204 = scmp.ne.s32.totalorder %s187, %s203
      %p205 = scmp.eq.s32.totalorder %s27, 0
      %p206 = por %p204, %p205
      %p207 = scmp.le.s32.totalorder 1, %s21
      %p208 = scmp.lt.s32.totalorder %s21, 3
      %p209 = pnand %p207, %p208
      %p210 = pneg %p209
      // Predicated region
      $region9: #{tpu_custom_call.1} parent=5 // pred_check
        _
      $region10: #{tpu_custom_call.1} parent=5 // pred_check_branch
        %212 = sbr.rel (%p209) target = $region12
      $region11: #{tpu_custom_call.1} parent=5 // pred_region
        %s213 = ssub.s32 %s21, 1
        // Predicated region
        $region13: #{tpu_custom_call.1} parent=11 // pred_check
          %p214 = pneg %p68
        $region14: #{tpu_custom_call.1} parent=11 // pred_check_branch
          %216 = sbr.rel (%p214) target = $region16
        $region15: #{tpu_custom_call.1} parent=11 // pred_region
          %218 = vsyncadd [#allocation6], 0
          %s219 = sshll.u32 %s1, 4
          %s220 = int_to_ptr.hbm [resolvable:$true] %s219
          %s221 = sshll.u32 [#allocation5], 4
          %s222 = int_to_ptr.vmem [resolvable:$true] %s221
          %227 = dma.hbm_to_vmem [thread:$0]  %s220, 6272, %s222, [#allocation6], 64, 64, 4
        $region16: #{tpu_custom_call.1} parent=11 // pred_fallthru
          _
        // Predicated region
        $region17: #{tpu_custom_call.1} parent=11 // pred_check
          %p228 = pneg %p89
        $region18: #{tpu_custom_call.1} parent=11 // pred_check_branch
          %230 = sbr.rel (%p228) target = $region20
        $region19: #{tpu_custom_call.1} parent=11 // pred_region
          _
        $region20: #{tpu_custom_call.1} parent=11 // pred_fallthru
          _
        // Predicated region
        $region21: #{tpu_custom_call.1} parent=11 // pred_check
          %p231 = pneg %p110
        $region22: #{tpu_custom_call.1} parent=11 // pred_check_branch
          %233 = sbr.rel (%p231) target = $region24
        $region23: #{tpu_custom_call.1} parent=11 // pred_region
          %235 = vsyncadd [#allocation6], 0
          %s236 = sshll.u32 %s3, 4
          %s237 = int_to_ptr.hbm [resolvable:$true] %s236
          %s238 = sshll.u32 [#allocation7], 4
          %s239 = int_to_ptr.vmem [resolvable:$true] %s238
          %244 = dma.hbm_to_vmem [thread:$0]  %s237, 1024, %s239, [#allocation6], 64, 64, 4
        $region24: #{tpu_custom_call.1} parent=11 // pred_fallthru
          _
        // Predicated region
        $region25: #{tpu_custom_call.1} parent=11 // pred_check
          %p245 = pneg %p131
        $region26: #{tpu_custom_call.1} parent=11 // pred_check_branch
          %247 = sbr.rel (%p245) target = $region28
        $region27: #{tpu_custom_call.1} parent=11 // pred_region
          _
        $region28: #{tpu_custom_call.1} parent=11 // pred_fallthru
          _
        // Predicated region
        $region29: #{tpu_custom_call.1} parent=11 // pred_check
          %p248 = pneg %p152
        $region30: #{tpu_custom_call.1} parent=11 // pred_check_branch
          %250 = sbr.rel (%p248) target = $region32
        $region31: #{tpu_custom_call.1} parent=11 // pred_region
          %252 = vsyncadd [#allocation9], 0
          %s253 = sshll.u32 %s5, 4
          %s254 = int_to_ptr.hbm [resolvable:$true] %s253
          %s255 = sshll.u32 [#allocation8], 4
          %s256 = int_to_ptr.vmem [resolvable:$true] %s255
          %261 = dma.hbm_to_vmem [thread:$0]  %s254, 1024, %s256, [#allocation9], 64, 64, 4
        $region32: #{tpu_custom_call.1} parent=11 // pred_fallthru
          _
        // Predicated region
        $region33: #{tpu_custom_call.1} parent=11 // pred_check
          %p262 = pneg %p173
        $region34: #{tpu_custom_call.1} parent=11 // pred_check_branch
          %264 = sbr.rel (%p262) target = $region36
        $region35: #{tpu_custom_call.1} parent=11 // pred_region
          _
        $region36: #{tpu_custom_call.1} parent=11 // pred_fallthru
          _
      $region12: #{tpu_custom_call.1} parent=5 // pred_fallthru
        _
      %p265 = scmp.lt.s32.totalorder %s21, 2
      // Predicated region
      $region37: #{tpu_custom_call.1} parent=5 // pred_check
        %p266 = pneg %p265
      $region38: #{tpu_custom_call.1} parent=5 // pred_check_branch
        %268 = sbr.rel (%p266) target = $region40
      $region39: #{tpu_custom_call.1} parent=5 // pred_region
        // Predicated region
        $region41: #{tpu_custom_call.1} parent=39 // pred_check
          %p269 = pneg %p41
        $region42: #{tpu_custom_call.1} parent=39 // pred_check_branch
          %271 = sbr.rel (%p269) target = $region44
        $region43: #{tpu_custom_call.1} parent=39 // pred_region
          %s272 = sand.u32 %s31, 1
          %s273 = scalar_lea.sflag [#allocation3], %s272
          %s274 = sand.u32 %s31, 1
          %s275 = smul.addr %s274, 56
          %s276 = scalar_lea.vmem [#allocation2], %s275
          %s277 = smul.u32 2, %s21
          %279 = vsyncadd %s273, 0
          %s280 = smul.addr %s277, 7
          %s281 = smul.addr %s280, 4
          %s282 = scalar_lea.hbm %s0, %s281
          %s283 = sshll.u32 %s282, 4
          %s284 = int_to_ptr.hbm [resolvable:$true] %s283
          %s285 = sshll.u32 %s276, 4
          %s286 = int_to_ptr.vmem [resolvable:$true] %s285
          %291 = dma.hbm_to_vmem [thread:$0]  %s284, 896, %s286, %s273, 448, 448, 28
        $region44: #{tpu_custom_call.1} parent=39 // pred_fallthru
          _
      $region40: #{tpu_custom_call.1} parent=5 // pred_fallthru
        _
      %p292 = scmp.le.s32.totalorder 1, %s21
      %p293 = scmp.lt.s32.totalorder %s21, 3
      %p294 = pnand %p292, %p293
      %p295 = pneg %p294
      // Predicated region
      $region45: #{tpu_custom_call.1} parent=5 // pred_check
        _
      $region46: #{tpu_custom_call.1} parent=5 // pred_check_branch
        %297 = sbr.rel (%p294) target = $region48
      $region47: #{tpu_custom_call.1} parent=5 // pred_region
        %s298 = ssub.s32 %s21, 1
        %s299 = sand.u32 %s34, 1
        %s300 = scalar_lea.sflag [#allocation3], %s299
        %s301 = sand.u32 %s34, 1
        %s302 = smul.addr %s301, 56
        %s303 = scalar_lea.vmem [#allocation2], %s302
        // Predicated region
        $region49: #{tpu_custom_call.1} parent=47 // pred_check
          %p304 = pneg %p47
        $region50: #{tpu_custom_call.1} parent=47 // pred_check_branch
          %306 = sbr.rel (%p304) target = $region52
        $region51: #{tpu_custom_call.1} parent=47 // pred_region
          %308 = dma.done %s300, 896
        $region52: #{tpu_custom_call.1} parent=47 // pred_fallthru
          _
        // Predicated region
        $region53: #{tpu_custom_call.1} parent=47 // pred_check
          %p309 = pneg %p68
        $region54: #{tpu_custom_call.1} parent=47 // pred_check_branch
          %311 = sbr.rel (%p309) target = $region56
        $region55: #{tpu_custom_call.1} parent=47 // pred_region
          %313 = dma.done [#allocation6], 6272
        $region56: #{tpu_custom_call.1} parent=47 // pred_fallthru
          _
        // Predicated region
        $region57: #{tpu_custom_call.1} parent=47 // pred_check
          %p314 = pneg %p110
        $region58: #{tpu_custom_call.1} parent=47 // pred_check_branch
          %316 = sbr.rel (%p314) target = $region60
        $region59: #{tpu_custom_call.1} parent=47 // pred_region
          %318 = dma.done [#allocation6], 1024
        $region60: #{tpu_custom_call.1} parent=47 // pred_fallthru
          _
        // Predicated region
        $region61: #{tpu_custom_call.1} parent=47 // pred_check
          %p319 = pneg %p152
        $region62: #{tpu_custom_call.1} parent=47 // pred_check_branch
          %321 = sbr.rel (%p319) target = $region64
        $region63: #{tpu_custom_call.1} parent=47 // pred_region
          %323 = dma.done [#allocation9], 1024
        $region64: #{tpu_custom_call.1} parent=47 // pred_fallthru
          _
        %s324 = sand.u32 %s34, 1
        %s325 = scalar_lea.sflag [#allocation3], %s324
        %s326 = sand.u32 %s34, 1
        %s327 = smul.addr %s326, 56
        %s328 = scalar_lea.vmem [#allocation2], %s327
        %p329 = pneg %p47
        %p330 = pneg %p44
        %p331 = pneg %p68
        %p332 = pneg %p65
        %p333 = pneg %p89
        %p334 = pneg %p86
        %p335 = pneg %p110
        %p336 = pneg %p107
        %p337 = pneg %p131
        %p338 = pneg %p128
        %p339 = pneg %p152
        %p340 = pneg %p149
        %p341 = pneg %p173
        %p342 = pneg %p170
        %p343 = pneg %p199
        %p344 = pneg %p196
        %s345 = sand.u32 %s186, 1
        %s346 = scalar_lea.sflag [#allocation4], %s345
        %s347 = sand.u32 %s186, 1
        %s348 = smul.addr %s347, 16
        %s349 = scalar_lea.vmem [#allocation10], %s348
        %s350 = smul.u32 2, %s26
        %s351 = smul.u32 2, %s26
        %v353 = vld [vmem:[%s303] sm:$0xff]
        %v354 = vld [vmem:[%s303 + $0x8] sm:$0xff]
        %v355 = vld [vmem:[%s303 + $0x10] sm:$0xff]
        %v356 = vld [vmem:[%s303 + $0x18] sm:$0xf]
        %v357 = vld [vmem:[%s303 + $0x1c] sm:$0xff]
        %v358 = vld [vmem:[%s303 + $0x24] sm:$0xff]
        %v359 = vld [vmem:[%s303 + $0x2c] sm:$0xff]
        %v360 = vld [vmem:[%s303 + $0x34] sm:$0xf]
        %v361 = vld [vmem:[#allocation5] sm:$0xf]
        %v362 = vld [vmem:[#allocation5 + $0x4] sm:$0xf]
        %v363 = vld [vmem:[#allocation5 + $0x8] sm:$0xf]
        %v364 = vld [vmem:[#allocation5 + $0xc] sm:$0xf]
        %v365 = vld [vmem:[#allocation5 + $0x10] sm:$0xf]
        %v366 = vld [vmem:[#allocation5 + $0x14] sm:$0xf]
        %v367 = vld [vmem:[#allocation5 + $0x18] sm:$0xf]
        %v368 = vld [vmem:[#allocation5 + $0x1c] sm:$0xf]
        %v369 = vld [vmem:[#allocation5 + $0x20] sm:$0xf]
        %v370 = vld [vmem:[#allocation5 + $0x24] sm:$0xf]
        %v371 = vld [vmem:[#allocation5 + $0x28] sm:$0xf]
        %v372 = vld [vmem:[#allocation5 + $0x2c] sm:$0xf]
        %v373 = vld [vmem:[#allocation5 + $0x30] sm:$0xf]
        %v374 = vld [vmem:[#allocation5 + $0x34] sm:$0xf]
        %v375 = vld [vmem:[#allocation5 + $0x38] sm:$0xf]
        %v376 = vld [vmem:[#allocation5 + $0x3c] sm:$0xf]
        %v377 = vld [vmem:[#allocation5 + $0x40] sm:$0xf]
        %v378 = vld [vmem:[#allocation5 + $0x44] sm:$0xf]
        %v379 = vld [vmem:[#allocation5 + $0x48] sm:$0xf]
        %v380 = vld [vmem:[#allocation5 + $0x4c] sm:$0xf]
        %v381 = vld [vmem:[#allocation5 + $0x50] sm:$0xf]
        %v382 = vld [vmem:[#allocation5 + $0x54] sm:$0xf]
        %v383 = vld [vmem:[#allocation5 + $0x58] sm:$0xf]
        %v384 = vld [vmem:[#allocation5 + $0x5c] sm:$0xf]
        %v385 = vld [vmem:[#allocation5 + $0x60] sm:$0xf]
        %v386 = vld [vmem:[#allocation5 + $0x64] sm:$0xf]
        %v387 = vld [vmem:[#allocation5 + $0x68] sm:$0xf]
        %v388 = vld [vmem:[#allocation5 + $0x6c] sm:$0xf]
        %v389 = vld [vmem:[#allocation5 + $0x70] sm:$0xf]
        %v390 = vld [vmem:[#allocation5 + $0x74] sm:$0xf]
        %v391 = vld [vmem:[#allocation5 + $0x78] sm:$0xf]
        %v392 = vld [vmem:[#allocation5 + $0x7c] sm:$0xf]
        %v393 = vld [vmem:[#allocation5 + $0x80] sm:$0xf]
        %v394 = vld [vmem:[#allocation5 + $0x84] sm:$0xf]
        %v395 = vld [vmem:[#allocation5 + $0x88] sm:$0xf]
        %v396 = vld [vmem:[#allocation5 + $0x8c] sm:$0xf]
        %v397 = vld [vmem:[#allocation5 + $0x90] sm:$0xf]
        %v398 = vld [vmem:[#allocation5 + $0x94] sm:$0xf]
        %v399 = vld [vmem:[#allocation5 + $0x98] sm:$0xf]
        %v400 = vld [vmem:[#allocation5 + $0x9c] sm:$0xf]
        %v401 = vld [vmem:[#allocation5 + $0xa0] sm:$0xf]
        %v402 = vld [vmem:[#allocation5 + $0xa4] sm:$0xf]
        %v403 = vld [vmem:[#allocation5 + $0xa8] sm:$0xf]
        %v404 = vld [vmem:[#allocation5 + $0xac] sm:$0xf]
        %v405 = vld [vmem:[#allocation5 + $0xb0] sm:$0xf]
        %v406 = vld [vmem:[#allocation5 + $0xb4] sm:$0xf]
        %v407 = vld [vmem:[#allocation5 + $0xb8] sm:$0xf]
        %v408 = vld [vmem:[#allocation5 + $0xbc] sm:$0xf]
        %v409 = vld [vmem:[#allocation5 + $0xc0] sm:$0xf]
        %v410 = vld [vmem:[#allocation5 + $0xc4] sm:$0xf]
        %v411 = vld [vmem:[#allocation5 + $0xc8] sm:$0xf]
        %v412 = vld [vmem:[#allocation5 + $0xcc] sm:$0xf]
        %v413 = vld [vmem:[#allocation5 + $0xd0] sm:$0xf]
        %v414 = vld [vmem:[#allocation5 + $0xd4] sm:$0xf]
        %v415 = vld [vmem:[#allocation5 + $0xd8] sm:$0xf]
        %v416 = vld [vmem:[#allocation5 + $0xdc] sm:$0xf]
        %v417 = vld [vmem:[#allocation5 + $0xe0] sm:$0xf]
        %v418 = vld [vmem:[#allocation5 + $0xe4] sm:$0xf]
        %v419 = vld [vmem:[#allocation5 + $0xe8] sm:$0xf]
        %v420 = vld [vmem:[#allocation5 + $0xec] sm:$0xf]
        %v421 = vld [vmem:[#allocation5 + $0xf0] sm:$0xf]
        %v422 = vld [vmem:[#allocation5 + $0xf4] sm:$0xf]
        %v423 = vld [vmem:[#allocation5 + $0xf8] sm:$0xf]
        %v424 = vld [vmem:[#allocation5 + $0xfc] sm:$0xf]
        %v425 = vld [vmem:[#allocation5 + $0x100] sm:$0xf]
        %v426 = vld [vmem:[#allocation5 + $0x104] sm:$0xf]
        %v427 = vld [vmem:[#allocation5 + $0x108] sm:$0xf]
        %v428 = vld [vmem:[#allocation5 + $0x10c] sm:$0xf]
        %v429 = vld [vmem:[#allocation5 + $0x110] sm:$0xf]
        %v430 = vld [vmem:[#allocation5 + $0x114] sm:$0xf]
        %v431 = vld [vmem:[#allocation5 + $0x118] sm:$0xf]
        %v432 = vld [vmem:[#allocation5 + $0x11c] sm:$0xf]
        %v433 = vld [vmem:[#allocation5 + $0x120] sm:$0xf]
        %v434 = vld [vmem:[#allocation5 + $0x124] sm:$0xf]
        %v435 = vld [vmem:[#allocation5 + $0x128] sm:$0xf]
        %v436 = vld [vmem:[#allocation5 + $0x12c] sm:$0xf]
        %v437 = vld [vmem:[#allocation5 + $0x130] sm:$0xf]
        %v438 = vld [vmem:[#allocation5 + $0x134] sm:$0xf]
        %v439 = vld [vmem:[#allocation5 + $0x138] sm:$0xf]
        %v440 = vld [vmem:[#allocation5 + $0x13c] sm:$0xf]
        %v441 = vld [vmem:[#allocation5 + $0x140] sm:$0xf]
        %v442 = vld [vmem:[#allocation5 + $0x144] sm:$0xf]
        %v443 = vld [vmem:[#allocation5 + $0x148] sm:$0xf]
        %v444 = vld [vmem:[#allocation5 + $0x14c] sm:$0xf]
        %v445 = vld [vmem:[#allocation5 + $0x150] sm:$0xf]
        %v446 = vld [vmem:[#allocation5 + $0x154] sm:$0xf]
        %v447 = vld [vmem:[#allocation5 + $0x158] sm:$0xf]
        %v448 = vld [vmem:[#allocation5 + $0x15c] sm:$0xf]
        %v449 = vld [vmem:[#allocation5 + $0x160] sm:$0xf]
        %v450 = vld [vmem:[#allocation5 + $0x164] sm:$0xf]
        %v451 = vld [vmem:[#allocation5 + $0x168] sm:$0xf]
        %v452 = vld [vmem:[#allocation5 + $0x16c] sm:$0xf]
        %v453 = vld [vmem:[#allocation5 + $0x170] sm:$0xf]
        %v454 = vld [vmem:[#allocation5 + $0x174] sm:$0xf]
        %v455 = vld [vmem:[#allocation5 + $0x178] sm:$0xf]
        %v456 = vld [vmem:[#allocation5 + $0x17c] sm:$0xf]
        %v457 = vld [vmem:[#allocation5 + $0x180] sm:$0xf]
        %v458 = vld [vmem:[#allocation5 + $0x184] sm:$0xf]
        %v459 = vld [vmem:[%s2] sm:$0x1]
        %v461 = vperm.slane %v459, 0
        %v471 = vunpack.c.l.b16 %v353
        %v472 = vunpack.c.h.b16 %v353
        %v473 = vunpack.c.l.b16 %v354
        %v474 = vunpack.c.h.b16 %v354
        %v475 = vunpack.c.l.b16 %v355
        %v476 = vunpack.c.h.b16 %v355
        %v477 = vunpack.c.l.b16 %v356
        %v478 = vunpack.c.l.b16 %v357
        %v479 = vunpack.c.h.b16 %v357
        %v480 = vunpack.c.l.b16 %v358
        %v481 = vunpack.c.h.b16 %v358
        %v482 = vunpack.c.l.b16 %v359
        %v483 = vunpack.c.h.b16 %v359
        %v484 = vunpack.c.l.b16 %v360
        %v485 = vpack.c.b16 %v478, %v471
        %v486 = vpack.c.b16 %v479, %v472
        %v487 = vpack.c.b16 %v480, %v473
        %v488 = vpack.c.b16 %v481, %v474
        %v489 = vpack.c.b16 %v482, %v475
        %v490 = vpack.c.b16 %v483, %v476
        %v491 = vpack.c.b16 %v484, %v477
        %v596 = vunpack.c.l.b16 %v361
        %v597 = vunpack.c.l.b16 %v362
        %v598 = vunpack.c.l.b16 %v363
        %v599 = vunpack.c.l.b16 %v364
        %v600 = vunpack.c.l.b16 %v365
        %v601 = vunpack.c.l.b16 %v366
        %v602 = vunpack.c.l.b16 %v367
        %v603 = vunpack.c.l.b16 %v368
        %v604 = vunpack.c.l.b16 %v369
        %v605 = vunpack.c.l.b16 %v370
        %v606 = vunpack.c.l.b16 %v371
        %v607 = vunpack.c.l.b16 %v372
        %v608 = vunpack.c.l.b16 %v373
        %v609 = vunpack.c.l.b16 %v374
        %v610 = vunpack.c.l.b16 %v375
        %v611 = vunpack.c.l.b16 %v376
        %v612 = vunpack.c.l.b16 %v377
        %v613 = vunpack.c.l.b16 %v378
        %v614 = vunpack.c.l.b16 %v379
        %v615 = vunpack.c.l.b16 %v380
        %v616 = vunpack.c.l.b16 %v381
        %v617 = vunpack.c.l.b16 %v382
        %v618 = vunpack.c.l.b16 %v383
        %v619 = vunpack.c.l.b16 %v384
        %v620 = vunpack.c.l.b16 %v385
        %v621 = vunpack.c.l.b16 %v386
        %v622 = vunpack.c.l.b16 %v387
        %v623 = vunpack.c.l.b16 %v388
        %v624 = vunpack.c.l.b16 %v389
        %v625 = vunpack.c.l.b16 %v390
        %v626 = vunpack.c.l.b16 %v391
        %v627 = vunpack.c.l.b16 %v392
        %v628 = vunpack.c.l.b16 %v393
        %v629 = vunpack.c.l.b16 %v394
        %v630 = vunpack.c.l.b16 %v395
        %v631 = vunpack.c.l.b16 %v396
        %v632 = vunpack.c.l.b16 %v397
        %v633 = vunpack.c.l.b16 %v398
        %v634 = vunpack.c.l.b16 %v399
        %v635 = vunpack.c.l.b16 %v400
        %v636 = vunpack.c.l.b16 %v401
        %v637 = vunpack.c.l.b16 %v402
        %v638 = vunpack.c.l.b16 %v403
        %v639 = vunpack.c.l.b16 %v404
        %v640 = vunpack.c.l.b16 %v405
        %v641 = vunpack.c.l.b16 %v406
        %v642 = vunpack.c.l.b16 %v407
        %v643 = vunpack.c.l.b16 %v408
        %v644 = vunpack.c.l.b16 %v409
        %v645 = vunpack.c.l.b16 %v410
        %v646 = vunpack.c.l.b16 %v411
        %v647 = vunpack.c.l.b16 %v412
        %v648 = vunpack.c.l.b16 %v413
        %v649 = vunpack.c.l.b16 %v414
        %v650 = vunpack.c.l.b16 %v415
        %v651 = vunpack.c.l.b16 %v416
        %v652 = vunpack.c.l.b16 %v417
        %v653 = vunpack.c.l.b16 %v418
        %v654 = vunpack.c.l.b16 %v419
        %v655 = vunpack.c.l.b16 %v420
        %v656 = vunpack.c.l.b16 %v421
        %v657 = vunpack.c.l.b16 %v422
        %v658 = vunpack.c.l.b16 %v423
        %v659 = vunpack.c.l.b16 %v424
        %v660 = vunpack.c.l.b16 %v425
        %v661 = vunpack.c.l.b16 %v426
        %v662 = vunpack.c.l.b16 %v427
        %v663 = vunpack.c.l.b16 %v428
        %v664 = vunpack.c.l.b16 %v429
        %v665 = vunpack.c.l.b16 %v430
        %v666 = vunpack.c.l.b16 %v431
        %v667 = vunpack.c.l.b16 %v432
        %v668 = vunpack.c.l.b16 %v433
        %v669 = vunpack.c.l.b16 %v434
        %v670 = vunpack.c.l.b16 %v435
        %v671 = vunpack.c.l.b16 %v436
        %v672 = vunpack.c.l.b16 %v437
        %v673 = vunpack.c.l.b16 %v438
        %v674 = vunpack.c.l.b16 %v439
        %v675 = vunpack.c.l.b16 %v440
        %v676 = vunpack.c.l.b16 %v441
        %v677 = vunpack.c.l.b16 %v442
        %v678 = vunpack.c.l.b16 %v443
        %v679 = vunpack.c.l.b16 %v444
        %v680 = vunpack.c.l.b16 %v445
        %v681 = vunpack.c.l.b16 %v446
        %v682 = vunpack.c.l.b16 %v447
        %v683 = vunpack.c.l.b16 %v448
        %v684 = vunpack.c.l.b16 %v449
        %v685 = vunpack.c.l.b16 %v450
        %v686 = vunpack.c.l.b16 %v451
        %v687 = vunpack.c.l.b16 %v452
        %v688 = vunpack.c.l.b16 %v453
        %v689 = vunpack.c.l.b16 %v454
        %v690 = vunpack.c.l.b16 %v455
        %v691 = vunpack.c.l.b16 %v456
        %v692 = vunpack.c.l.b16 %v457
        %v693 = vunpack.c.l.b16 %v458
        %v694 = vpack.c.b16 %v597, %v596
        %v695 = vpack.c.b16 %v599, %v598
        %v696 = vpack.c.b16 %v601, %v600
        %v697 = vpack.c.b16 %v603, %v602
        %v698 = vpack.c.b16 %v605, %v604
        %v699 = vpack.c.b16 %v607, %v606
        %v700 = vpack.c.b16 %v609, %v608
        %v701 = vpack.c.b16 %v611, %v610
        %v702 = vpack.c.b16 %v613, %v612
        %v703 = vpack.c.b16 %v615, %v614
        %v704 = vpack.c.b16 %v617, %v616
        %v705 = vpack.c.b16 %v619, %v618
        %v706 = vpack.c.b16 %v621, %v620
        %v707 = vpack.c.b16 %v623, %v622
        %v708 = vpack.c.b16 %v625, %v624
        %v709 = vpack.c.b16 %v627, %v626
        %v710 = vpack.c.b16 %v629, %v628
        %v711 = vpack.c.b16 %v631, %v630
        %v712 = vpack.c.b16 %v633, %v632
        %v713 = vpack.c.b16 %v635, %v634
        %v714 = vpack.c.b16 %v637, %v636
        %v715 = vpack.c.b16 %v639, %v638
        %v716 = vpack.c.b16 %v641, %v640
        %v717 = vpack.c.b16 %v643, %v642
        %v718 = vpack.c.b16 %v645, %v644
        %v719 = vpack.c.b16 %v647, %v646
        %v720 = vpack.c.b16 %v649, %v648
        %v721 = vpack.c.b16 %v651, %v650
        %v722 = vpack.c.b16 %v653, %v652
        %v723 = vpack.c.b16 %v655, %v654
        %v724 = vpack.c.b16 %v657, %v656
        %v725 = vpack.c.b16 %v659, %v658
        %v726 = vpack.c.b16 %v661, %v660
        %v727 = vpack.c.b16 %v663, %v662
        %v728 = vpack.c.b16 %v665, %v664
        %v729 = vpack.c.b16 %v667, %v666
        %v730 = vpack.c.b16 %v669, %v668
        %v731 = vpack.c.b16 %v671, %v670
        %v732 = vpack.c.b16 %v673, %v672
        %v733 = vpack.c.b16 %v675, %v674
        %v734 = vpack.c.b16 %v677, %v676
        %v735 = vpack.c.b16 %v679, %v678
        %v736 = vpack.c.b16 %v681, %v680
        %v737 = vpack.c.b16 %v683, %v682
        %v738 = vpack.c.b16 %v685, %v684
        %v739 = vpack.c.b16 %v687, %v686
        %v740 = vpack.c.b16 %v689, %v688
        %v741 = vpack.c.b16 %v691, %v690
        %v742 = vpack.c.b16 %v693, %v692
        %vm792 = vcmask 130048
        %v794 = vsel %vm792, %v491, 0
        %796 = vmatpush.bf16.msra.mxu0 %v701
        %797 = vmatpush.bf16.msra.mxu0 %v700
        %798 = vmatpush.bf16.msra.mxu0 %v699
        %799 = vmatpush.bf16.msra.mxu0 %v698
        %800 = vmatpush.bf16.msra.mxu0 %v697
        %801 = vmatpush.bf16.msra.mxu0 %v696
        %802 = vmatpush.bf16.msra.mxu0 %v695
        %803 = vmatpush.bf16.msra.mxu0 %v694
        %804 = vmatmul.bf16.gmra.mxu0 %v485
        %v805 = vpop.f32.mrf.mxu0
        %v806 = vadd.f32 %v461, %v805
        %v807 = vpop.f32.mrf.mxu0
        %v808 = vadd.f32 %v461, %v807
        %809 = vdwg.mxu0
        %810 = vmatpush.bf16.msra.mxu0 %v709
        %811 = vmatpush.bf16.msra.mxu0 %v708
        %812 = vmatpush.bf16.msra.mxu0 %v707
        %813 = vmatpush.bf16.msra.mxu0 %v706
        %814 = vmatpush.bf16.msra.mxu0 %v705
        %815 = vmatpush.bf16.msra.mxu0 %v704
        %816 = vmatpush.bf16.msra.mxu0 %v703
        %817 = vmatpush.bf16.msra.mxu0 %v702
        %818 = vmatmul.bf16.gmra.mxu0 %v486
        %v819 = vpop.f32.mrf.mxu0
        %v820 = vadd.f32 %v806, %v819
        %v821 = vpop.f32.mrf.mxu0
        %v822 = vadd.f32 %v808, %v821
        %823 = vdwg.mxu0
        %824 = vmatpush.bf16.msra.mxu0 %v717
        %825 = vmatpush.bf16.msra.mxu0 %v716
        %826 = vmatpush.bf16.msra.mxu0 %v715
        %827 = vmatpush.bf16.msra.mxu0 %v714
        %828 = vmatpush.bf16.msra.mxu0 %v713
        %829 = vmatpush.bf16.msra.mxu0 %v712
        %830 = vmatpush.bf16.msra.mxu0 %v711
        %831 = vmatpush.bf16.msra.mxu0 %v710
        %832 = vmatmul.bf16.gmra.mxu0 %v487
        %v833 = vpop.f32.mrf.mxu0
        %v834 = vadd.f32 %v820, %v833
        %v835 = vpop.f32.mrf.mxu0
        %v836 = vadd.f32 %v822, %v835
        %837 = vdwg.mxu0
        %838 = vmatpush.bf16.msra.mxu0 %v725
        %839 = vmatpush.bf16.msra.mxu0 %v724
        %840 = vmatpush.bf16.msra.mxu0 %v723
        %841 = vmatpush.bf16.msra.mxu0 %v722
        %842 = vmatpush.bf16.msra.mxu0 %v721
        %843 = vmatpush.bf16.msra.mxu0 %v720
        %844 = vmatpush.bf16.msra.mxu0 %v719
        %845 = vmatpush.bf16.msra.mxu0 %v718
        %846 = vmatmul.bf16.gmra.mxu0 %v488
        %v847 = vpop.f32.mrf.mxu0
        %v848 = vadd.f32 %v834, %v847
        %v849 = vpop.f32.mrf.mxu0
        %v850 = vadd.f32 %v836, %v849
        %851 = vdwg.mxu0
        %852 = vmatpush.bf16.msra.mxu0 %v733
        %853 = vmatpush.bf16.msra.mxu0 %v732
        %854 = vmatpush.bf16.msra.mxu0 %v731
        %855 = vmatpush.bf16.msra.mxu0 %v730
        %856 = vmatpush.bf16.msra.mxu0 %v729
        %857 = vmatpush.bf16.msra.mxu0 %v728
        %858 = vmatpush.bf16.msra.mxu0 %v727
        %859 = vmatpush.bf16.msra.mxu0 %v726
        %860 = vmatmul.bf16.gmra.mxu0 %v489
        %v861 = vpop.f32.mrf.mxu0
        %v862 = vadd.f32 %v848, %v861
        %v863 = vpop.f32.mrf.mxu0
        %v864 = vadd.f32 %v850, %v863
        %865 = vdwg.mxu0
        %866 = vmatpush.bf16.msra.mxu0 %v741
        %867 = vmatpush.bf16.msra.mxu0 %v740
        %868 = vmatpush.bf16.msra.mxu0 %v739
        %869 = vmatpush.bf16.msra.mxu0 %v738
        %870 = vmatpush.bf16.msra.mxu0 %v737
        %871 = vmatpush.bf16.msra.mxu0 %v736
        %872 = vmatpush.bf16.msra.mxu0 %v735
        %873 = vmatpush.bf16.msra.mxu0 %v734
        %874 = vmatmul.bf16.gmra.mxu0 %v490
        %v875 = vpop.f32.mrf.mxu0
        %v876 = vadd.f32 %v862, %v875
        %v877 = vpop.f32.mrf.mxu0
        %v878 = vadd.f32 %v864, %v877
        %879 = vdwg.mxu0
        %880 = vmatpush.bf16.msra.mxu0 0
        %881 = vmatpush.bf16.msra.mxu0 0
        %882 = vmatpush.bf16.msra.mxu0 0
        %883 = vmatpush.bf16.msra.mxu0 0
        %884 = vmatpush.bf16.msra.mxu0 0
        %885 = vmatpush.bf16.msra.mxu0 0
        %886 = vmatpush.bf16.msra.mxu0 0
        %887 = vmatpush.bf16.msra.mxu0 %v742
        %888 = vmatmul.bf16.gmra.mxu0 %v794
        %v889 = vpop.f32.mrf.mxu0
        %v890 = vadd.f32 %v876, %v889
        %v891 = vpop.f32.mrf.mxu0
        %v892 = vadd.f32 %v878, %v891
        %893 = vdwg.mxu0
        %v894 = vmax.f32 %v890, 0.0
        %v895 = vmax.f32 %v892, 0.0
        %v896 = vpack.c.bf16 %v895, %v894
        %v897 = vld [vmem:[#allocation7] sm:$0xf]
        %v898 = vld [vmem:[#allocation7 + $0x4] sm:$0xf]
        %v899 = vld [vmem:[#allocation7 + $0x8] sm:$0xf]
        %v900 = vld [vmem:[#allocation7 + $0xc] sm:$0xf]
        %v901 = vld [vmem:[#allocation7 + $0x10] sm:$0xf]
        %v902 = vld [vmem:[#allocation7 + $0x14] sm:$0xf]
        %v903 = vld [vmem:[#allocation7 + $0x18] sm:$0xf]
        %v904 = vld [vmem:[#allocation7 + $0x1c] sm:$0xf]
        %v905 = vld [vmem:[#allocation7 + $0x20] sm:$0xf]
        %v906 = vld [vmem:[#allocation7 + $0x24] sm:$0xf]
        %v907 = vld [vmem:[#allocation7 + $0x28] sm:$0xf]
        %v908 = vld [vmem:[#allocation7 + $0x2c] sm:$0xf]
        %v909 = vld [vmem:[#allocation7 + $0x30] sm:$0xf]
        %v910 = vld [vmem:[#allocation7 + $0x34] sm:$0xf]
        %v911 = vld [vmem:[#allocation7 + $0x38] sm:$0xf]
        %v912 = vld [vmem:[#allocation7 + $0x3c] sm:$0xf]
        %v913 = vld [vmem:[%s4] sm:$0x1]
        %v915 = vperm.slane %v913, 0
        %v933 = vunpack.c.l.b16 %v897
        %v934 = vunpack.c.l.b16 %v898
        %v935 = vunpack.c.l.b16 %v899
        %v936 = vunpack.c.l.b16 %v900
        %v937 = vunpack.c.l.b16 %v901
        %v938 = vunpack.c.l.b16 %v902
        %v939 = vunpack.c.l.b16 %v903
        %v940 = vunpack.c.l.b16 %v904
        %v941 = vunpack.c.l.b16 %v905
        %v942 = vunpack.c.l.b16 %v906
        %v943 = vunpack.c.l.b16 %v907
        %v944 = vunpack.c.l.b16 %v908
        %v945 = vunpack.c.l.b16 %v909
        %v946 = vunpack.c.l.b16 %v910
        %v947 = vunpack.c.l.b16 %v911
        %v948 = vunpack.c.l.b16 %v912
        %v949 = vpack.c.b16 %v934, %v933
        %v950 = vpack.c.b16 %v936, %v935
        %v951 = vpack.c.b16 %v938, %v937
        %v952 = vpack.c.b16 %v940, %v939
        %v953 = vpack.c.b16 %v942, %v941
        %v954 = vpack.c.b16 %v944, %v943
        %v955 = vpack.c.b16 %v946, %v945
        %v956 = vpack.c.b16 %v948, %v947
        %965 = vmatpush.bf16.msra.mxu0 %v956
        %966 = vmatpush.bf16.msra.mxu0 %v955
        %967 = vmatpush.bf16.msra.mxu0 %v954
        %968 = vmatpush.bf16.msra.mxu0 %v953
        %969 = vmatpush.bf16.msra.mxu0 %v952
        %970 = vmatpush.bf16.msra.mxu0 %v951
        %971 = vmatpush.bf16.msra.mxu0 %v950
        %972 = vmatpush.bf16.msra.mxu0 %v949
        %973 = vmatmul.bf16.gmra.mxu0 %v896
        %v974 = vpop.f32.mrf.mxu0
        %v975 = vadd.f32 %v915, %v974
        %v976 = vpop.f32.mrf.mxu0
        %v977 = vadd.f32 %v915, %v976
        %978 = vdwg.mxu0
        %v979 = vmax.f32 %v975, 0.0
        %v980 = vmax.f32 %v977, 0.0
        %v981 = vpack.c.bf16 %v980, %v979
        %v982 = vld [vmem:[#allocation8] sm:$0xf]
        %v983 = vld [vmem:[#allocation8 + $0x4] sm:$0xf]
        %v984 = vld [vmem:[#allocation8 + $0x8] sm:$0xf]
        %v985 = vld [vmem:[#allocation8 + $0xc] sm:$0xf]
        %v986 = vld [vmem:[#allocation8 + $0x10] sm:$0xf]
        %v987 = vld [vmem:[#allocation8 + $0x14] sm:$0xf]
        %v988 = vld [vmem:[#allocation8 + $0x18] sm:$0xf]
        %v989 = vld [vmem:[#allocation8 + $0x1c] sm:$0xf]
        %v990 = vld [vmem:[#allocation8 + $0x20] sm:$0xf]
        %v991 = vld [vmem:[#allocation8 + $0x24] sm:$0xf]
        %v992 = vld [vmem:[#allocation8 + $0x28] sm:$0xf]
        %v993 = vld [vmem:[#allocation8 + $0x2c] sm:$0xf]
        %v994 = vld [vmem:[#allocation8 + $0x30] sm:$0xf]
        %v995 = vld [vmem:[#allocation8 + $0x34] sm:$0xf]
        %v996 = vld [vmem:[#allocation8 + $0x38] sm:$0xf]
        %v997 = vld [vmem:[#allocation8 + $0x3c] sm:$0xf]
        %v998 = vld [vmem:[%s6] sm:$0x1]
        %v1000 = vperm.slane %v998, 0
        %v1018 = vunpack.c.l.b16 %v982
        %v1019 = vunpack.c.l.b16 %v983
        %v1020 = vunpack.c.l.b16 %v984
        %v1021 = vunpack.c.l.b16 %v985
        %v1022 = vunpack.c.l.b16 %v986
        %v1023 = vunpack.c.l.b16 %v987
        %v1024 = vunpack.c.l.b16 %v988
        %v1025 = vunpack.c.l.b16 %v989
        %v1026 = vunpack.c.l.b16 %v990
        %v1027 = vunpack.c.l.b16 %v991
        %v1028 = vunpack.c.l.b16 %v992
        %v1029 = vunpack.c.l.b16 %v993
        %v1030 = vunpack.c.l.b16 %v994
        %v1031 = vunpack.c.l.b16 %v995
        %v1032 = vunpack.c.l.b16 %v996
        %v1033 = vunpack.c.l.b16 %v997
        %v1034 = vpack.c.b16 %v1019, %v1018
        %v1035 = vpack.c.b16 %v1021, %v1020
        %v1036 = vpack.c.b16 %v1023, %v1022
        %v1037 = vpack.c.b16 %v1025, %v1024
        %v1038 = vpack.c.b16 %v1027, %v1026
        %v1039 = vpack.c.b16 %v1029, %v1028
        %v1040 = vpack.c.b16 %v1031, %v1030
        %v1041 = vpack.c.b16 %v1033, %v1032
        %1050 = vmatpush.bf16.msra.mxu0 %v1041
        %1051 = vmatpush.bf16.msra.mxu0 %v1040
        %1052 = vmatpush.bf16.msra.mxu0 %v1039
        %1053 = vmatpush.bf16.msra.mxu0 %v1038
        %1054 = vmatpush.bf16.msra.mxu0 %v1037
        %1055 = vmatpush.bf16.msra.mxu0 %v1036
        %1056 = vmatpush.bf16.msra.mxu0 %v1035
        %1057 = vmatpush.bf16.msra.mxu0 %v1034
        %1058 = vmatmul.bf16.gmra.mxu0 %v981
        %v1059 = vpop.f32.mrf.mxu0
        %v1060 = vadd.f32 %v1000, %v1059
        %v1061 = vpop.f32.mrf.mxu0
        %v1062 = vadd.f32 %v1000, %v1061
        %1063 = vdwg.mxu0
        %1064 = vst [vmem:[%s349] sm:$0xff] %v1060
        %1065 = vst [vmem:[%s349 + $0x8] sm:$0xff] %v1062
        %s1066 = sand.u32 %s186, 1
        %s1067 = scalar_lea.sflag [#allocation4], %s1066
        %s1068 = sand.u32 %s186, 1
        %s1069 = smul.addr %s1068, 16
        %s1070 = scalar_lea.vmem [#allocation10], %s1069
        // Predicated region
        $region65: #{tpu_custom_call.1} parent=47 // pred_check
          %p1071 = pneg %p196
        $region66: #{tpu_custom_call.1} parent=47 // pred_check_branch
          %1073 = sbr.rel (%p1071) target = $region68
        $region67: #{tpu_custom_call.1} parent=47 // pred_region
          %s1074 = smul.u32 2, %s26
          %1076 = vsyncadd %s1067, 0
          %s1077 = smul.addr %s1074, 8
          %s1078 = scalar_lea.hbm %s7, %s1077
          %s1079 = sshll.u32 %s1070, 4
          %s1080 = int_to_ptr.vmem [resolvable:$true] %s1079
          %s1081 = sshll.u32 %s1078, 4
          %s1082 = int_to_ptr.hbm [resolvable:$true] %s1081
          %1087 = dma.vmem_to_hbm [thread:$0]  %s1080, 256, %s1082, %s1067, 128, 128, 8
        $region68: #{tpu_custom_call.1} parent=47 // pred_fallthru
          _
      $region48: #{tpu_custom_call.1} parent=5 // pred_fallthru
        _
      %p1088 = scmp.le.s32.totalorder 2, %s21
      // Predicated region
      $region69: #{tpu_custom_call.1} parent=5 // pred_check
        %p1089 = pneg %p1088
      $region70: #{tpu_custom_call.1} parent=5 // pred_check_branch
        %1091 = sbr.rel (%p1089) target = $region72
      $region71: #{tpu_custom_call.1} parent=5 // pred_region
        %s1092 = ssub.s32 %s21, 2
        // Predicated region
        $region73: #{tpu_custom_call.1} parent=71 // pred_check
          %p1093 = pneg %p202
        $region74: #{tpu_custom_call.1} parent=71 // pred_check_branch
          %1095 = sbr.rel (%p1093) target = $region76
        $region75: #{tpu_custom_call.1} parent=71 // pred_region
          %s1096 = sand.u32 %s187, 1
          %s1097 = scalar_lea.sflag [#allocation4], %s1096
          %s1098 = sand.u32 %s187, 1
          %s1099 = smul.addr %s1098, 16
          %s1100 = scalar_lea.vmem [#allocation10], %s1099
          %1102 = dma.done %s1097, 256
        $region76: #{tpu_custom_call.1} parent=71 // pred_fallthru
          _
      $region72: #{tpu_custom_call.1} parent=5 // pred_fallthru
        _
    $region6: #{tpu_custom_call.1} parent=1 // loop_footer
      %s25 = sadd.s32 1, %s21
    $region7: #{tpu_custom_call.1} parent=1 // loop_footer_branch
      %20 = sbr.rel target = $region3
    $region8: #{tpu_custom_call.1} parent=1 // loop_exit
      _
    %1103 = vsyncpa [#allocation3], 1
    %s1104 = scalar_lea.sflag [#allocation3], 1
    %1105 = vsyncpa %s1104, 1
    %1106 = vsyncpa [#allocation6], 1
    %1107 = vsyncpa [#allocation9], 1
    %1108 = vsyncpa [#allocation4], 1
    %s1109 = scalar_lea.sflag [#allocation4], 1
    %1110 = vsyncpa %s1109, 1

</llo_original>
